<compile_context>
chip_gen: v7x
topology: tpu7x:2x2x1
jax: 0.10.0
libtpu: 0.0.40
codegen_flags: <defaults>
</compile_context>

<pallas_src>
import jax
import jax.numpy as jnp
from jax.experimental import pallas as pl
from jax.experimental.pallas import tpu as pltpu


# Below this many *output* bytes a custom-call dispatch costs more than the
# copy itself and also blocks XLA from fusing the broadcast into neighbours.
_PALLAS_MIN_OUT_BYTES = 512 * 1024

# Target bytes of input moved per grid step on the dense path (output is 3x).
# 2 MiB in + 6 MiB out = 8 MiB/step, ~16 MiB double-buffered: amortizes the
# ~0.35 us per-step overhead even at v7x's 3.2 TB/s; an explicit
# vmem_limit_bytes below keeps this legal on every generation.
_TARGET_IN_BLOCK_BYTES = 2 * 1024 * 1024

# Fallback (H*W not a multiple of 128): lane-dense (1, n)/(3, n) layout whose
# blocks pad to 8 sublanes in VMEM, so keep per-block bytes modest.
_FALLBACK_BLOCK_BYTES = 256 * 1024


def _repeat_channels_dense_kernel(x_ref, o_ref):
    # x_ref: (TR, 128) block, o_ref: (3, TR, 128) block.  One dense load,
    # three dense (8,128)-aligned stores -> HBM-bandwidth-bound copy.
    row = x_ref[...]
    o_ref[0, :, :] = row
    o_ref[1, :, :] = row
    o_ref[2, :, :] = row


def _repeat_channels_flat_kernel(x_ref, o_ref):
    # Fallback layout: x_ref (1, TN), o_ref (3, TN).
    row = x_ref[...]
    o_ref[0:1, :] = row
    o_ref[1:2, :] = row
    o_ref[2:3, :] = row


def _sublane_multiple(itemsize: int) -> int:
    # Minimum sublane tile per dtype: f32 -> 8, bf16 -> 16, int8/uint8 -> 32.
    return 8 * max(1, 4 // itemsize)


def _choose_block_rows(rows: int, itemsize: int) -> int:
    sub = _sublane_multiple(itemsize)
    if rows <= sub:
        return rows  # full-extent block: always a legal block shape
    # Dtype-aware: equal bytes per step regardless of itemsize.
    target_rows = max(sub, (_TARGET_IN_BLOCK_BYTES // (128 * itemsize)) // sub * sub)
    # Cap so the "parallel" grid axis has >= 2 steps (lets v7x's two
    # TensorCores split the copy; a harmless extra step on v5e/v6e).
    half_rows = -(-((rows + 1) // 2) // sub) * sub
    return min(target_rows, half_rows)


def resize_channels(
    image: jax.Array,
    num_channels: int = 3,
    *,
    min_pallas_out_bytes: int = _PALLAS_MIN_OUT_BYTES,
) -> jax.Array:
    """JAX/Pallas equivalent of ResizeChannels.forward (CHW single image).

    `num_channels` is carried for parity with the module __init__ (unused by
    forward, which always repeats to 3 — same as the PyTorch code).
    """
    del num_channels  # forward() hard-codes repeat(3, 1, 1), matching PyTorch.
    if image.shape[0] != 1:
        return image  # static-shape pass-through branch, same as PyTorch

    _, H, W = image.shape
    n = H * W
    itemsize = jnp.dtype(image.dtype).itemsize

    # Tiny images: XLA's fused broadcast is already at roofline and can fuse
    # with neighbouring ops; skip the custom-call overhead.
    if 3 * n * itemsize < min_pallas_out_bytes:
        return jnp.broadcast_to(image, (3, H, W))

    # N bytes in + 3N bytes out.
    cost = pl.CostEstimate(
        flops=0, transcendentals=0, bytes_accessed=4 * n * itemsize
    )

    if n % 128 == 0:
        # -------- dense (rows, 128) main path --------
        rows = n // 128
        br = _choose_block_rows(rows, itemsize)
        grid = (pl.cdiv(rows, br),)
        # 1 input + 3 output blocks, double-buffered, plus slack.
        block_bytes = br * 128 * itemsize
        vmem_limit = max(2 * 4 * block_bytes + (2 << 20), 24 << 20)

        out = pl.pallas_call(
            _repeat_channels_dense_kernel,
            out_shape=jax.ShapeDtypeStruct((3, rows, 128), image.dtype),
            grid=grid,
            in_specs=[pl.BlockSpec((br, 128), lambda i: (i, 0))],
            out_specs=pl.BlockSpec((3, br, 128), lambda i: (0, i, 0)),
            compiler_params=pltpu.CompilerParams(
                dimension_semantics=("parallel",),
                vmem_limit_bytes=vmem_limit,
            ),
            cost_estimate=cost,
        )(image.reshape(rows, 128))
        return out.reshape(3, H, W)

    # -------- fallback: H*W not a multiple of 128 --------
    tn = min(n, max(128, (_FALLBACK_BLOCK_BYTES // itemsize) // 128 * 128))
    grid = (pl.cdiv(n, tn),)
    # Both the (1, tn) and (3, tn) blocks pad to 8 sublanes in VMEM.
    padded_block_bytes = 8 * tn * itemsize
    vmem_limit = max(2 * 2 * padded_block_bytes + (2 << 20), 24 << 20)

    out = pl.pallas_call(
        _repeat_channels_flat_kernel,
        out_shape=jax.ShapeDtypeStruct((3, n), image.dtype),
        grid=grid,
        in_specs=[pl.BlockSpec((1, tn), lambda i: (0, i))],
        out_specs=pl.BlockSpec((3, tn), lambda i: (0, i)),
        compiler_params=pltpu.CompilerParams(
            dimension_semantics=("parallel",),
            vmem_limit_bytes=vmem_limit,
        ),
        cost_estimate=cost,
    )(image.reshape(1, n))
    return out.reshape(3, H, W)


if __name__ == "__main__":
    key = jax.random.PRNGKey(0)
    k1, k2, k3, k4, k5, k6 = jax.random.split(key, 6)

    # Case 1: small single-channel image, H*W multiple of 128; force the
    # Pallas dense (rows, 128) path despite being below the bypass size.
    x1 = jax.random.normal(k1, (1, 64, 128), dtype=jnp.float32)
    y1 = jax.block_until_ready(resize_channels(x1, min_pallas_out_bytes=0))
    assert y1.shape == (3, 64, 128), y1.shape
    assert jnp.array_equal(y1, jnp.tile(x1, (3, 1, 1))), "dense path mismatch"

    # Case 2: larger image through the default threshold (dense path,
    # >= 2 grid steps on the parallel axis).
    x2 = jax.random.normal(k2, (1, 384, 512), dtype=jnp.float32)
    y2 = jax.block_until_ready(resize_channels(x2))
    assert y2.shape == (3, 384, 512), y2.shape
    assert jnp.array_equal(y2, jnp.tile(x2, (3, 1, 1))), "dense path mismatch"

    # Case 3: bf16 image exercises the dtype-aware block sizing (sublane 16).
    x3 = jax.random.normal(k3, (1, 96, 256), dtype=jnp.bfloat16)
    y3 = jax.block_until_ready(resize_channels(x3, min_pallas_out_bytes=0))
    assert y3.shape == (3, 96, 256), y3.shape
    assert jnp.array_equal(y3, jnp.tile(x3, (3, 1, 1))), "bf16 dense mismatch"

    # Case 4: H*W NOT a multiple of 128 -> lane-dense fallback Pallas path.
    x4 = jax.random.normal(k4, (1, 200, 130), dtype=jnp.float32)
    y4 = jax.block_until_ready(resize_channels(x4, min_pallas_out_bytes=0))
    assert y4.shape == (3, 200, 130), y4.shape
    assert jnp.array_equal(y4, jnp.tile(x4, (3, 1, 1))), "fallback mismatch"

    # Case 5: tiny single-channel image -> fused-broadcast bypass (no Pallas).
    x5 = jax.random.normal(k5, (1, 16, 16), dtype=jnp.float32)
    y5 = jax.block_until_ready(resize_channels(x5))
    assert y5.shape == (3, 16, 16), y5.shape
    assert jnp.array_equal(y5, jnp.tile(x5, (3, 1, 1))), "bypass mismatch"

    # Case 6: already multi-channel image -> returned unchanged.
    x6 = jax.random.normal(k6, (3, 16, 16), dtype=jnp.float32)
    y6 = jax.block_until_ready(resize_channels(x6))
    assert y6.shape == (3, 16, 16), y6.shape
    assert jnp.array_equal(y6, x6), "pass-through mismatch"

    print("KERNEL_OK")
</pallas_src>

<mosaic_0001>
module attributes {stable_mosaic.version = 11 : i64} {
  func.func @_repeat_channels_dense_kernel(%arg0: i32, %arg1: memref<32x128xf32, #tpu.memory_space<vmem>>, %arg2: memref<3x32x128xf32, #tpu.memory_space<vmem>>) attributes {dimension_semantics = [#tpu.dimension_semantics<parallel>], iteration_bounds = array<i64: 2>, scalar_prefetch = 0 : i64, scratch_operands = 0 : i64, tpu.core_type = #tpu.core_type<tc>, window_params = [{transform_indices = @transform_0, window_bounds = array<i64: 32, 128>}, {transform_indices = @transform_1, window_bounds = array<i64: 3, 32, 128>}]} {
    %c0 = arith.constant 0 : index
    %c0_0 = arith.constant 0 : index
    %0 = vector.load %arg1[%c0, %c0_0] : memref<32x128xf32, #tpu.memory_space<vmem>>, vector<32x128xf32>
    %c0_1 = arith.constant 0 : index
    %c0_2 = arith.constant 0 : index
    %c0_3 = arith.constant 0 : index
    %1 = vector.load %arg2[%c0_1, %c0_2, %c0_3] : memref<3x32x128xf32, #tpu.memory_space<vmem>>, vector<1x32x128xf32>
    %2 = vector.shape_cast %1 : vector<1x32x128xf32> to vector<32x128xf32>
    %3 = vector.shape_cast %0 : vector<32x128xf32> to vector<1x32x128xf32>
    tpu.vector_store %arg2[%c0_1, %c0_2, %c0_3], %3 {strides = array<i32>} : memref<3x32x128xf32, #tpu.memory_space<vmem>>, vector<1x32x128xf32>,
    %c1 = arith.constant 1 : index
    %c0_4 = arith.constant 0 : index
    %c0_5 = arith.constant 0 : index
    %4 = vector.load %arg2[%c1, %c0_4, %c0_5] : memref<3x32x128xf32, #tpu.memory_space<vmem>>, vector<1x32x128xf32>
    %5 = vector.shape_cast %4 : vector<1x32x128xf32> to vector<32x128xf32>
    %6 = vector.shape_cast %0 : vector<32x128xf32> to vector<1x32x128xf32>
    tpu.vector_store %arg2[%c1, %c0_4, %c0_5], %6 {strides = array<i32>} : memref<3x32x128xf32, #tpu.memory_space<vmem>>, vector<1x32x128xf32>,
    %c2 = arith.constant 2 : index
    %c0_6 = arith.constant 0 : index
    %c0_7 = arith.constant 0 : index
    %7 = vector.load %arg2[%c2, %c0_6, %c0_7] : memref<3x32x128xf32, #tpu.memory_space<vmem>>, vector<1x32x128xf32>
    %8 = vector.shape_cast %7 : vector<1x32x128xf32> to vector<32x128xf32>
    %9 = vector.shape_cast %0 : vector<32x128xf32> to vector<1x32x128xf32>
    tpu.vector_store %arg2[%c2, %c0_6, %c0_7], %9 {strides = array<i32>} : memref<3x32x128xf32, #tpu.memory_space<vmem>>, vector<1x32x128xf32>,
    return
  }
  func.func @transform_0(%arg0: i32) -> (i32, i32) {
    %c0_i32 = arith.constant 0 : i32
    %c0_i32_0 = arith.constant 0 : i32
    return %arg0, %c0_i32 : i32, i32
  }
  func.func @transform_1(%arg0: i32) -> (i32, i32, i32) {
    %c0_i32 = arith.constant 0 : i32
    %c0_i32_0 = arith.constant 0 : i32
    %c0_i32_1 = arith.constant 0 : i32
    return %c0_i32, %arg0, %c0_i32_0 : i32, i32, i32
  }
}

</mosaic_0001>

<llo_original>
// kernel: tpu_custom_call.1
$region0: #{tpu_custom_call.1}
  #allocation0 [shape = 'u32[]', space=smem, size = 0x4, offset = 0x4, fixed_abs, tag = 'smem constant byte address 0x4 - core index']
  #allocation1 [shape = 'u32[144,128]{1,0:T(1,128)}', space=vmem, size = 0x12000, scoped, tag = 'internal scratch']
  #allocation6 [shape = 's32[]', space=sflag, size = 0x4, offset = 0, fixed_abs, tag = 'sflag constant byte address 0x0 - dummy sync flag']
  %s0 = inlined_call_operand.hbm [shape: f32[64,128], index: 0, kind: input, shape index: {}]
  %s1 = inlined_call_operand.hbm [shape: f32[3,64,128], index: 1, kind: output, shape index: {}]
  %s2 = sld [smem:[#allocation0]]
  $region41: #{tpu_custom_call.1} parent=0
    _
  %s4 = ssub.s32 1, %s2
  %s5 = scalar_select 0, %s4, %s2
  $region1: #{tpu_custom_call.1} parent=0
    #allocation2 [shape = 'u8[32768]{0}', space=vmem, size = 0x8000, scoped, tag = 'input window, operand 0']
    #allocation3 [shape = 's32[2]{0}', space=sflag, size = 0x8, scoped, tag = 'scoped memory for tpu_custom_call.1']
    #allocation4 [shape = 's32[2]{0}', space=sflag, size = 0x8, scoped, tag = 'scoped memory for tpu_custom_call.1']
    #allocation5 [shape = 'u8[98304]{0}', space=vmem, size = 0x18000, scoped, tag = 'output window, operand 0']
    %6 = vsyncpa [#allocation3], 0
    %s7 = scalar_lea.sflag [#allocation3], 1
    %8 = vsyncpa %s7, 0
    %9 = vsyncpa [#allocation4], 0
    %s10 = scalar_lea.sflag [#allocation4], 1
    %11 = vsyncpa %s10, 0
    loop: start=0, step=1, limit=4
    $region2: #{tpu_custom_call.1} parent=1 // loop_pre_header
      _
    $region3: #{tpu_custom_call.1} parent=1 // loop_header
      %s13 = sphi 0, %s17
      %p14 = scmp.ge.s32.totalorder %s13, 4
      %s23 = sphi 0, %s25
      %s26 = sphi 0, %s23
      %s27 = sphi 0, %s26
      %s43 = sphi 0, %s27
      %s49 = sphi 0, %s51
      %s52 = sphi 0, %s49
      %s53 = sphi 0, %s52
      %s69 = sphi 0, %s53
    $region4: #{tpu_custom_call.1} parent=1 // loop_header_branch
      %16 = sbr.rel (%p14) target = $region8
    $region5: #{tpu_custom_call.1} parent=1 // loop_body
      %s18 = ssub.s32 %s13, 1
      %s19 = ssub.s32 %s13, 2
      %s20 = sadd.s32 %s13, 1
      %s21 = ssub.s32 %s13, %s20
      %p22 = scmp.eq.s32.totalorder %s21, 0
      %s24 = sadd.s32 %s23, 1
      %s25 = scalar_select %p22, %s23, %s24
      %p28 = pneg %p22
      %p29 = scmp.eq.s32.totalorder %s13, 1
      %p30 = por %p28, %p29
      %p31 = scmp.ne.s32.totalorder %s23, %s26
      %p32 = scmp.eq.s32.totalorder %s13, 0
      %p33 = por %p31, %p32
      %p34 = scmp.ne.s32.totalorder %s23, %s26
      %p35 = scmp.eq.s32.totalorder %s18, 1
      %p36 = por %p34, %p35
      %p37 = scmp.ne.s32.totalorder %s26, %s27
      %p38 = scmp.eq.s32.totalorder %s18, 0
      %p39 = por %p37, %p38
      %p40 = scmp.ne.s32.totalorder %s26, %s27
      %p41 = scmp.eq.s32.totalorder %s19, 1
      %p42 = por %p40, %p41
      %p44 = scmp.ne.s32.totalorder %s27, %s43
      %p45 = scmp.eq.s32.totalorder %s19, 0
      %p46 = por %p44, %p45
      %s47 = ssub.s32 %s13, %s20
      %p48 = scmp.eq.s32.totalorder %s47, 0
      %s50 = sadd.s32 %s49, 1
      %s51 = scalar_select %p48, %s49, %s50
      %p54 = pneg %p48
      %p55 = scmp.eq.s32.totalorder %s13, 1
      %p56 = por %p54, %p55
      %p57 = scmp.ne.s32.totalorder %s49, %s52
      %p58 = scmp.eq.s32.totalorder %s13, 0
      %p59 = por %p57, %p58
      %p60 = scmp.ne.s32.totalorder %s49, %s52
      %p61 = scmp.eq.s32.totalorder %s18, 1
      %p62 = por %p60, %p61
      %p63 = scmp.ne.s32.totalorder %s52, %s53
      %p64 = scmp.eq.s32.totalorder %s18, 0
      %p65 = por %p63, %p64
      %p66 = scmp.ne.s32.totalorder %s52, %s53
      %p67 = scmp.eq.s32.totalorder %s19, 1
      %p68 = por %p66, %p67
      %p70 = scmp.ne.s32.totalorder %s53, %s69
      %p71 = scmp.eq.s32.totalorder %s19, 0
      %p72 = por %p70, %p71
      %p73 = scmp.le.s32.totalorder 1, %s13
      %p74 = scmp.lt.s32.totalorder %s13, 3
      %p75 = pnand %p73, %p74
      %p76 = pneg %p75
      // Predicated region
      $region9: #{tpu_custom_call.1} parent=5 // pred_check
        _
      $region10: #{tpu_custom_call.1} parent=5 // pred_check_branch
        %78 = sbr.rel (%p75) target = $region12
      $region11: #{tpu_custom_call.1} parent=5 // pred_region
        %s79 = ssub.s32 %s13, 1
      $region12: #{tpu_custom_call.1} parent=5 // pred_fallthru
        _
      %p80 = scmp.lt.s32.totalorder %s13, 2
      // Predicated region
      $region13: #{tpu_custom_call.1} parent=5 // pred_check
        %p81 = pneg %p80
      $region14: #{tpu_custom_call.1} parent=5 // pred_check_branch
        %83 = sbr.rel (%p81) target = $region16
      $region15: #{tpu_custom_call.1} parent=5 // pred_region
        // Predicated region
        $region17: #{tpu_custom_call.1} parent=15 // pred_check
          %p84 = pneg %p33
        $region18: #{tpu_custom_call.1} parent=15 // pred_check_branch
          %86 = sbr.rel (%p84) target = $region20
        $region19: #{tpu_custom_call.1} parent=15 // pred_region
          %s87 = sand.u32 %s23, 1
          %s88 = scalar_lea.sflag [#allocation3], %s87
          %s89 = sand.u32 %s23, 1
          %s90 = smul.addr %s89, 32
          %s91 = scalar_lea.vmem [#allocation2], %s90
          %s92 = smul.u32 4, %s13
          %s94 = ssub.s32 512, 512
          %95 = vsyncadd %s88, %s94
          %s96 = smul.addr %s92, 128
          %s97 = scalar_lea.hbm %s0, %s96
          %s98 = sshll.u32 %s91, 4
          %s99 = int_to_ptr.vmem [resolvable:$true] %s98
          %104 = dma.hbm_to_vmem [thread:$0]  %s97, 512, %s99, %s88, 128, 128, 8
        $region20: #{tpu_custom_call.1} parent=15 // pred_fallthru
          _
      $region16: #{tpu_custom_call.1} parent=5 // pred_fallthru
        _
      %p105 = scmp.le.s32.totalorder 1, %s13
      %p106 = scmp.lt.s32.totalorder %s13, 3
      %p107 = pnand %p105, %p106
      %p108 = pneg %p107
      // Predicated region
      $region21: #{tpu_custom_call.1} parent=5 // pred_check
        _
      $region22: #{tpu_custom_call.1} parent=5 // pred_check_branch
        %110 = sbr.rel (%p107) target = $region24
      $region23: #{tpu_custom_call.1} parent=5 // pred_region
        %s111 = ssub.s32 %s13, 1
        %s112 = sand.u32 %s26, 1
        %s113 = scalar_lea.sflag [#allocation3], %s112
        %s114 = sand.u32 %s26, 1
        %s115 = smul.addr %s114, 32
        %s116 = scalar_lea.vmem [#allocation2], %s115
        // Predicated region
        $region25: #{tpu_custom_call.1} parent=23 // pred_check
          %p117 = pneg %p39
        $region26: #{tpu_custom_call.1} parent=23 // pred_check_branch
          %119 = sbr.rel (%p117) target = $region28
        $region27: #{tpu_custom_call.1} parent=23 // pred_region
          %120 = dma.done %s113, 512
        $region28: #{tpu_custom_call.1} parent=23 // pred_fallthru
          _
        %s121 = sand.u32 %s26, 1
        %s122 = scalar_lea.sflag [#allocation3], %s121
        %s123 = sand.u32 %s26, 1
        %s124 = smul.addr %s123, 32
        %s125 = scalar_lea.vmem [#allocation2], %s124
        %p126 = pneg %p39
        %p127 = pneg %p36
        %p128 = pneg %p65
        %p129 = pneg %p62
        %s130 = sand.u32 %s52, 1
        %s131 = scalar_lea.sflag [#allocation4], %s130
        %s132 = sand.u32 %s52, 1
        %s133 = smul.addr %s132, 96
        %s134 = scalar_lea.vmem [#allocation5], %s133
        %s135 = smul.u32 4, %s18
        %s136 = smul.u32 4, %s18
        %v137 = vld [vmem:[%s116] sm:$0xff]
        %v138 = vld [vmem:[%s116 + $0x8] sm:$0xff]
        %v139 = vld [vmem:[%s116 + $0x10] sm:$0xff]
        %v140 = vld [vmem:[%s116 + $0x18] sm:$0xff]
        %141 = vst [vmem:[%s134] sm:$0xff] %v137
        %142 = vst [vmem:[%s134 + $0x8] sm:$0xff] %v138
        %143 = vst [vmem:[%s134 + $0x10] sm:$0xff] %v139
        %144 = vst [vmem:[%s134 + $0x18] sm:$0xff] %v140
        %s145 = scalar_lea.vmem %s134, 32 [#allocation5]
        %146 = vst [vmem:[%s145] sm:$0xff] %v137
        %147 = vst [vmem:[%s145 + $0x8] sm:$0xff] %v138
        %148 = vst [vmem:[%s145 + $0x10] sm:$0xff] %v139
        %149 = vst [vmem:[%s145 + $0x18] sm:$0xff] %v140
        %s150 = scalar_lea.vmem %s134, 64 [#allocation5]
        %151 = vst [vmem:[%s150] sm:$0xff] %v137
        %152 = vst [vmem:[%s150 + $0x8] sm:$0xff] %v138
        %153 = vst [vmem:[%s150 + $0x10] sm:$0xff] %v139
        %154 = vst [vmem:[%s150 + $0x18] sm:$0xff] %v140
        %s155 = sand.u32 %s52, 1
        %s156 = scalar_lea.sflag [#allocation4], %s155
        %s157 = sand.u32 %s52, 1
        %s158 = smul.addr %s157, 96
        %s159 = scalar_lea.vmem [#allocation5], %s158
        // Predicated region
        $region29: #{tpu_custom_call.1} parent=23 // pred_check
          %p160 = pneg %p62
        $region30: #{tpu_custom_call.1} parent=23 // pred_check_branch
          %162 = sbr.rel (%p160) target = $region32
        $region31: #{tpu_custom_call.1} parent=23 // pred_region
          #allocation7 [shape = 'u32[6]{0}', space=smem, size = 0x18, scoped, tag = 'DMA stride descriptor']
          %s163 = smul.u32 4, %s18
          %s165 = ssub.s32 1536, 1536
          %166 = vsyncadd %s156, %s165
          %s167 = smul.addr %s163, 128
          %s168 = scalar_lea.hbm %s1, %s167
          %s170 = sshll.u32 1, 14
          %s171 = sxor.u32 4294967295, %s170
          %s174 = sshll.u32 7, 18
          %s175 = sxor.u32 4294967295, %s174
          %s176 = sand.u32 0, %s175
          %s178 = sor.u32 %s176, 0
          %s180 = sshll.u32 3, 24
          %s181 = sxor.u32 4294967295, %s180
          %s182 = sand.u32 %s178, %s181
          %s184 = sor.u32 %s182, 0
          %s185 = sshll.u32 %s159, 4
          %s186 = int_to_ptr.vmem [resolvable:$true] %s185
          %192 = sst [smem:[#allocation7]] 512
          %s193 = scalar_lea.smem [#allocation7], 1
          %194 = sst [smem:[%s193]] 1024
          %s195 = scalar_lea.smem [#allocation7], 2
          %196 = sst [smem:[%s195]] 4
          %s197 = scalar_lea.smem [#allocation7], 3
          %198 = sst [smem:[%s197]] 128
          %s199 = scalar_lea.smem [#allocation7], 4
          %200 = sst [smem:[%s199]] 128
          %s201 = scalar_lea.smem [#allocation7], 5
          %202 = sst [smem:[%s201]] 8
          %204 = dma.general %s186, 1536, %s168, %s156, [#allocation6], [#allocation7], %s184, 0
        $region32: #{tpu_custom_call.1} parent=23 // pred_fallthru
          _
      $region24: #{tpu_custom_call.1} parent=5 // pred_fallthru
        _
      %p205 = scmp.le.s32.totalorder 2, %s13
      // Predicated region
      $region33: #{tpu_custom_call.1} parent=5 // pred_check
        %p206 = pneg %p205
      $region34: #{tpu_custom_call.1} parent=5 // pred_check_branch
        %208 = sbr.rel (%p206) target = $region36
      $region35: #{tpu_custom_call.1} parent=5 // pred_region
        %s209 = ssub.s32 %s13, 2
        // Predicated region
        $region37: #{tpu_custom_call.1} parent=35 // pred_check
          %p210 = pneg %p68
        $region38: #{tpu_custom_call.1} parent=35 // pred_check_branch
          %212 = sbr.rel (%p210) target = $region40
        $region39: #{tpu_custom_call.1} parent=35 // pred_region
          %s213 = sand.u32 %s53, 1
          %s214 = scalar_lea.sflag [#allocation4], %s213
          %s215 = sand.u32 %s53, 1
          %s216 = smul.addr %s215, 96
          %s217 = scalar_lea.vmem [#allocation5], %s216
          %218 = dma.done %s214, 1536
        $region40: #{tpu_custom_call.1} parent=35 // pred_fallthru
          _
      $region36: #{tpu_custom_call.1} parent=5 // pred_fallthru
        _
    $region6: #{tpu_custom_call.1} parent=1 // loop_footer
      %s17 = sadd.s32 1, %s13
    $region7: #{tpu_custom_call.1} parent=1 // loop_footer_branch
      %12 = sbr.rel target = $region3
    $region8: #{tpu_custom_call.1} parent=1 // loop_exit
      _
    %219 = vsyncpa [#allocation3], 1
    %s220 = scalar_lea.sflag [#allocation3], 1
    %221 = vsyncpa %s220, 1
    %222 = vsyncpa [#allocation4], 1
    %s223 = scalar_lea.sflag [#allocation4], 1
    %224 = vsyncpa %s223, 1

</llo_original>
